<compile_context>
chip_gen: v7x
topology: tpu7x:2x2x1
jax: 0.10.0
libtpu: 0.0.40
codegen_flags: <defaults>
</compile_context>

<pallas_src>
import jax
import jax.numpy as jnp
from jax.experimental import pallas as pl
from jax.experimental.pallas import tpu as pltpu

LANE = 128


def _sh_kernel(d_ref, o_ref):
    # d_ref: (3, S, 128) f32    o_ref: (16, S, 128) out_dtype  (batch folded into (S,128) slabs)
    x = d_ref[0, :, :]
    y = d_ref[1, :, :]
    z = d_ref[2, :, :]

    xy = x * y
    xz = x * z
    yz = y * z
    x2 = x * x
    y2 = y * y
    z2 = z * z
    x2_m_y2 = x2 - y2
    one_m_5z2 = 1.0 - 5.0 * z2

    ot = o_ref.dtype
    o_ref[0, :, :] = jnp.full(x.shape, 0.28209479177387814, dtype=ot)
    o_ref[1, :, :] = (-0.48860251190291987 * y).astype(ot)
    o_ref[2, :, :] = (0.48860251190291987 * z).astype(ot)
    o_ref[3, :, :] = (-0.48860251190291987 * x).astype(ot)
    o_ref[4, :, :] = (1.0925484305920792 * xy).astype(ot)
    o_ref[5, :, :] = (-1.0925484305920792 * yz).astype(ot)
    o_ref[6, :, :] = (0.94617469575756 * z2 - 0.31539156525252).astype(ot)
    o_ref[7, :, :] = (-1.0925484305920792 * xz).astype(ot)
    o_ref[8, :, :] = (0.5462742152960396 * x2_m_y2).astype(ot)
    o_ref[9, :, :] = (0.5900435899266435 * y * (y2 - 3.0 * x2)).astype(ot)
    o_ref[10, :, :] = (2.890611442640554 * xy * z).astype(ot)
    o_ref[11, :, :] = (0.4570457994644657 * y * one_m_5z2).astype(ot)
    o_ref[12, :, :] = (0.3731763325901154 * z * (5.0 * z2 - 3.0)).astype(ot)
    o_ref[13, :, :] = (0.4570457994644657 * x * one_m_5z2).astype(ot)
    o_ref[14, :, :] = (1.445305721320277 * z * x2_m_y2).astype(ot)
    o_ref[15, :, :] = (0.5900435899266435 * x * (3.0 * y2 - x2)).astype(ot)


def _num_tensorcores() -> int:
    # v5e / v6e expose one TensorCore per JAX device; v4 / v7x megacore chips expose two
    # (the "parallel" grid axis shards across them).
    try:
        kind = jax.devices()[0].device_kind.lower()
    except Exception:
        return 1
    if "v4" in kind or "v7" in kind or "7x" in kind:
        return 2
    return 1


def _out_granule(out_dtype) -> int:
    # Column granularity so output sublane packing stays clean (f32:(8,128), bf16:(16,128)).
    itemsize = jnp.dtype(out_dtype).itemsize
    return {4: 8, 2: 16, 1: 32}.get(itemsize, 8)


def _pick_block_cols(C: int, max_block_cols: int, num_cores: int, granule: int) -> int:
    def round_up(v):
        return pl.cdiv(max(v, 1), granule) * granule

    max_block_cols = max(granule, (max_block_cols // granule) * granule)
    Cg = round_up(C)
    if num_cores <= 1:
        # Single TensorCore: no benefit from splitting; biggest block under the cap keeps the
        # per-step DMA on the HBM roofline and amortizes the ~0.35us/step overhead.
        S = Cg
    else:
        # Megacore: >= 2 steps per core so each core pipelines (prefetch next / write back
        # previous), but keep blocks >= 64 columns (~8K batch elements) when there is work.
        S = round_up(pl.cdiv(C, 2 * num_cores))
        S = max(64 if Cg >= 64 else granule, S)
        S = min(S, Cg)
    return max(granule, min(max_block_cols, S))


def _vmem_limit_bytes(S: int, out_itemsize: int):
    block_bytes = 3 * S * LANE * 4 + 16 * S * LANE * out_itemsize
    est = 2 * block_bytes  # double-buffered input + output
    if est <= 12 * 1024 * 1024:
        return None  # comfortably inside every generation's scoped-VMEM default (16/32/32 MiB)
    # Explicit limit with headroom; stay well under v7x's 64 MiB physical VMEM per TensorCore.
    return min(int(est * 1.5) + (4 << 20), 48 << 20)


def _encode_soa_padded(d_soa_f32, out_dtype, max_block_cols, num_tensorcores):
    """[3, B] f32 SoA directions -> ([16, Bp] lane-major padded output, B)."""
    assert d_soa_f32.ndim == 2 and d_soa_f32.shape[0] == 3, "expected [3, B] SoA directions"
    B = d_soa_f32.shape[1]
    C = pl.cdiv(B, LANE)  # number of 128-lane columns of batch
    granule = _out_granule(out_dtype)
    cores = _num_tensorcores() if num_tensorcores is None else num_tensorcores
    S = _pick_block_cols(C, max_block_cols, cores, granule)
    Cp = pl.cdiv(C, S) * S
    Bp = Cp * LANE
    if Bp != B:
        d_soa_f32 = jnp.pad(d_soa_f32, ((0, 0), (0, Bp - B)))
    d3 = d_soa_f32.reshape(3, Cp, LANE)

    out = pl.pallas_call(
        _sh_kernel,
        out_shape=jax.ShapeDtypeStruct((16, Cp, LANE), out_dtype),
        grid=(Cp // S,),
        in_specs=[pl.BlockSpec((3, S, LANE), lambda i: (0, i, 0))],
        out_specs=pl.BlockSpec((16, S, LANE), lambda i: (0, i, 0)),
        compiler_params=pltpu.CompilerParams(
            dimension_semantics=("parallel",),
            vmem_limit_bytes=_vmem_limit_bytes(S, jnp.dtype(out_dtype).itemsize),
        ),
    )(d3)
    return out.reshape(16, Bp), B


def dir_encoder_soa(dirs_soa, *, out_dtype=jnp.float32, max_block_cols=512,
                    num_tensorcores=None):
    """Fast path: dirs_soa [3, B] (SoA, unit-norm) -> embedding [16, B] lane-major.

    No wrapper-side transposes.  Pass B as a multiple of 128 (ideally of block*128) for a
    zero-copy reshape into the kernel.  Padded tail (if any) is sliced off here; consumers
    fusing on the raw padded slab must mask it (it holds nonzero constants in ch. 0 and 6).
    """
    out, B = _encode_soa_padded(dirs_soa.astype(jnp.float32), out_dtype,
                                max_block_cols, num_tensorcores)
    return out[:, :B]


def dir_encoder_lane_major(dirs, **kwargs):
    """dirs [B, 3] -> embedding [16, B] lane-major (input transpose only)."""
    return dir_encoder_soa(dirs.astype(jnp.float32).T, **kwargs)


def dir_encoder(dirs, *, out_dtype=jnp.float32, max_block_cols=512, num_tensorcores=None):
    """PyTorch-convention convenience path: dirs [B, 3] -> embedding [B, 16].

    Pays one XLA input transpose and one output transpose (extra HBM passes).  Prefer
    dir_encoder_soa() — or fuse the SH encode into the consumer's first matmul — on hot paths.
    """
    assert dirs.ndim == 2 and dirs.shape[1] == 3, "expected [B, 3] directions"
    out, B = _encode_soa_padded(dirs.astype(jnp.float32).T, out_dtype,
                                max_block_cols, num_tensorcores)
    return out.T[:B]


def _reference(dirs):
    # Pure-JAX reference matching the Taichi kernel semantics.
    x, y, z = dirs[:, 0], dirs[:, 1], dirs[:, 2]
    xy, xz, yz = x * y, x * z, y * z
    x2, y2, z2 = x * x, y * y, z * z
    return jnp.stack(
        [
            jnp.full_like(x, 0.28209479177387814),
            -0.48860251190291987 * y,
            0.48860251190291987 * z,
            -0.48860251190291987 * x,
            1.0925484305920792 * xy,
            -1.0925484305920792 * yz,
            0.94617469575756 * z2 - 0.31539156525252,
            -1.0925484305920792 * xz,
            0.5462742152960396 * x2 - 0.5462742152960396 * y2,
            0.5900435899266435 * y * (-3.0 * x2 + y2),
            2.890611442640554 * xy * z,
            0.4570457994644657 * y * (1.0 - 5.0 * z2),
            0.3731763325901154 * z * (5.0 * z2 - 3.0),
            0.4570457994644657 * x * (1.0 - 5.0 * z2),
            1.445305721320277 * z * (x2 - y2),
            0.5900435899266435 * x * (-x2 + 3.0 * y2),
        ],
        axis=-1,
    )


if __name__ == "__main__":
    # TODO(synk): only the forward pass is implemented; the Taichi autograd backward is not.
    key = jax.random.PRNGKey(0)

    # Small primary test (module-scale batch), PyTorch-convention path.
    B = 8
    raw = jax.random.normal(key, (B, 3), dtype=jnp.float32)
    dirs = raw / jnp.linalg.norm(raw, axis=-1, keepdims=True)  # unit directions
    emb = dir_encoder(dirs)
    jax.block_until_ready(emb)
    ref = _reference(dirs)
    assert emb.shape == (B, 16) and emb.dtype == jnp.float32
    assert jnp.allclose(emb, ref, atol=1e-5, rtol=1e-5)

    # Non-multiple-of-128 batch: exercises the padding path.
    B2 = 300
    raw2 = jax.random.normal(jax.random.PRNGKey(0), (B2, 3), dtype=jnp.float32)
    dirs2 = raw2 / jnp.linalg.norm(raw2, axis=-1, keepdims=True)
    emb2 = dir_encoder(dirs2)
    jax.block_until_ready(emb2)
    ref2 = _reference(dirs2)
    assert emb2.shape == (B2, 16)
    assert jnp.allclose(emb2, ref2, atol=1e-5, rtol=1e-5)

    # SoA fast path (no wrapper transposes), lane-major output.
    emb2_soa = dir_encoder_soa(dirs2.T)
    jax.block_until_ready(emb2_soa)
    assert emb2_soa.shape == (16, B2)
    assert jnp.allclose(emb2_soa.T, ref2, atol=1e-5, rtol=1e-5)

    # bf16-output option (math in f32, cast at the store): looser parity by design.
    emb2_bf16 = dir_encoder_soa(dirs2.T, out_dtype=jnp.bfloat16)
    jax.block_until_ready(emb2_bf16)
    assert emb2_bf16.dtype == jnp.bfloat16 and emb2_bf16.shape == (16, B2)
    assert jnp.allclose(emb2_bf16.astype(jnp.float32).T, ref2, atol=2e-2, rtol=2e-2)

    print("KERNEL_OK")
</pallas_src>

<mosaic_0001>
module attributes {stable_mosaic.version = 11 : i64} {
  func.func @_sh_kernel(%arg0: i32, %arg1: memref<3x8x128xf32, #tpu.memory_space<vmem>>, %arg2: memref<16x8x128xf32, #tpu.memory_space<vmem>>) attributes {dimension_semantics = [#tpu.dimension_semantics<parallel>], iteration_bounds = array<i64: 1>, scalar_prefetch = 0 : i64, scratch_operands = 0 : i64, tpu.core_type = #tpu.core_type<tc>, window_params = [{transform_indices = @transform_0, window_bounds = array<i64: 3, 8, 128>}, {transform_indices = @transform_1, window_bounds = array<i64: 16, 8, 128>}]} {
    %c0 = arith.constant 0 : index
    %c0_0 = arith.constant 0 : index
    %c0_1 = arith.constant 0 : index
    %0 = vector.load %arg1[%c0, %c0_0, %c0_1] : memref<3x8x128xf32, #tpu.memory_space<vmem>>, vector<1x8x128xf32>
    %1 = vector.shape_cast %0 : vector<1x8x128xf32> to vector<8x128xf32>
    %c1 = arith.constant 1 : index
    %c0_2 = arith.constant 0 : index
    %c0_3 = arith.constant 0 : index
    %2 = vector.load %arg1[%c1, %c0_2, %c0_3] : memref<3x8x128xf32, #tpu.memory_space<vmem>>, vector<1x8x128xf32>
    %3 = vector.shape_cast %2 : vector<1x8x128xf32> to vector<8x128xf32>
    %c2 = arith.constant 2 : index
    %c0_4 = arith.constant 0 : index
    %c0_5 = arith.constant 0 : index
    %4 = vector.load %arg1[%c2, %c0_4, %c0_5] : memref<3x8x128xf32, #tpu.memory_space<vmem>>, vector<1x8x128xf32>
    %5 = vector.shape_cast %4 : vector<1x8x128xf32> to vector<8x128xf32>
    %6 = arith.mulf %1, %3 : vector<8x128xf32>
    %7 = arith.mulf %1, %5 : vector<8x128xf32>
    %8 = arith.mulf %3, %5 : vector<8x128xf32>
    %9 = arith.mulf %1, %1 : vector<8x128xf32>
    %10 = arith.mulf %3, %3 : vector<8x128xf32>
    %11 = arith.mulf %5, %5 : vector<8x128xf32>
    %12 = arith.subf %9, %10 : vector<8x128xf32>
    %cst = arith.constant 5.000000e+00 : f32
    %13 = vector.broadcast %cst : f32 to vector<8x128xf32>
    %14 = arith.mulf %13, %11 : vector<8x128xf32>
    %cst_6 = arith.constant 1.000000e+00 : f32
    %15 = vector.broadcast %cst_6 : f32 to vector<8x128xf32>
    %16 = arith.subf %15, %14 : vector<8x128xf32>
    %cst_7 = arith.constant 0.282094806 : f32
    %17 = vector.broadcast %cst_7 : f32 to vector<8x128xf32>
    %c0_8 = arith.constant 0 : index
    %c0_9 = arith.constant 0 : index
    %c0_10 = arith.constant 0 : index
    %18 = vector.load %arg2[%c0_8, %c0_9, %c0_10] : memref<16x8x128xf32, #tpu.memory_space<vmem>>, vector<1x8x128xf32>
    %19 = vector.shape_cast %18 : vector<1x8x128xf32> to vector<8x128xf32>
    %20 = vector.shape_cast %17 : vector<8x128xf32> to vector<1x8x128xf32>
    tpu.vector_store %arg2[%c0_8, %c0_9, %c0_10], %20 {strides = array<i32>} : memref<16x8x128xf32, #tpu.memory_space<vmem>>, vector<1x8x128xf32>,
    %cst_11 = arith.constant -0.488602519 : f32
    %21 = vector.broadcast %cst_11 : f32 to vector<8x128xf32>
    %22 = arith.mulf %21, %3 : vector<8x128xf32>
    %c1_12 = arith.constant 1 : index
    %c0_13 = arith.constant 0 : index
    %c0_14 = arith.constant 0 : index
    %23 = vector.load %arg2[%c1_12, %c0_13, %c0_14] : memref<16x8x128xf32, #tpu.memory_space<vmem>>, vector<1x8x128xf32>
    %24 = vector.shape_cast %23 : vector<1x8x128xf32> to vector<8x128xf32>
    %25 = vector.shape_cast %22 : vector<8x128xf32> to vector<1x8x128xf32>
    tpu.vector_store %arg2[%c1_12, %c0_13, %c0_14], %25 {strides = array<i32>} : memref<16x8x128xf32, #tpu.memory_space<vmem>>, vector<1x8x128xf32>,
    %cst_15 = arith.constant 0.488602519 : f32
    %26 = vector.broadcast %cst_15 : f32 to vector<8x128xf32>
    %27 = arith.mulf %26, %5 : vector<8x128xf32>
    %c2_16 = arith.constant 2 : index
    %c0_17 = arith.constant 0 : index
    %c0_18 = arith.constant 0 : index
    %28 = vector.load %arg2[%c2_16, %c0_17, %c0_18] : memref<16x8x128xf32, #tpu.memory_space<vmem>>, vector<1x8x128xf32>
    %29 = vector.shape_cast %28 : vector<1x8x128xf32> to vector<8x128xf32>
    %30 = vector.shape_cast %27 : vector<8x128xf32> to vector<1x8x128xf32>
    tpu.vector_store %arg2[%c2_16, %c0_17, %c0_18], %30 {strides = array<i32>} : memref<16x8x128xf32, #tpu.memory_space<vmem>>, vector<1x8x128xf32>,
    %cst_19 = arith.constant -0.488602519 : f32
    %31 = vector.broadcast %cst_19 : f32 to vector<8x128xf32>
    %32 = arith.mulf %31, %1 : vector<8x128xf32>
    %c3 = arith.constant 3 : index
    %c0_20 = arith.constant 0 : index
    %c0_21 = arith.constant 0 : index
    %33 = vector.load %arg2[%c3, %c0_20, %c0_21] : memref<16x8x128xf32, #tpu.memory_space<vmem>>, vector<1x8x128xf32>
    %34 = vector.shape_cast %33 : vector<1x8x128xf32> to vector<8x128xf32>
    %35 = vector.shape_cast %32 : vector<8x128xf32> to vector<1x8x128xf32>
    tpu.vector_store %arg2[%c3, %c0_20, %c0_21], %35 {strides = array<i32>} : memref<16x8x128xf32, #tpu.memory_space<vmem>>, vector<1x8x128xf32>,
    %cst_22 = arith.constant 1.09254849 : f32
    %36 = vector.broadcast %cst_22 : f32 to vector<8x128xf32>
    %37 = arith.mulf %36, %6 : vector<8x128xf32>
    %c4 = arith.constant 4 : index
    %c0_23 = arith.constant 0 : index
    %c0_24 = arith.constant 0 : index
    %38 = vector.load %arg2[%c4, %c0_23, %c0_24] : memref<16x8x128xf32, #tpu.memory_space<vmem>>, vector<1x8x128xf32>
    %39 = vector.shape_cast %38 : vector<1x8x128xf32> to vector<8x128xf32>
    %40 = vector.shape_cast %37 : vector<8x128xf32> to vector<1x8x128xf32>
    tpu.vector_store %arg2[%c4, %c0_23, %c0_24], %40 {strides = array<i32>} : memref<16x8x128xf32, #tpu.memory_space<vmem>>, vector<1x8x128xf32>,
    %cst_25 = arith.constant -1.09254849 : f32
    %41 = vector.broadcast %cst_25 : f32 to vector<8x128xf32>
    %42 = arith.mulf %41, %8 : vector<8x128xf32>
    %c5 = arith.constant 5 : index
    %c0_26 = arith.constant 0 : index
    %c0_27 = arith.constant 0 : index
    %43 = vector.load %arg2[%c5, %c0_26, %c0_27] : memref<16x8x128xf32, #tpu.memory_space<vmem>>, vector<1x8x128xf32>
    %44 = vector.shape_cast %43 : vector<1x8x128xf32> to vector<8x128xf32>
    %45 = vector.shape_cast %42 : vector<8x128xf32> to vector<1x8x128xf32>
    tpu.vector_store %arg2[%c5, %c0_26, %c0_27], %45 {strides = array<i32>} : memref<16x8x128xf32, #tpu.memory_space<vmem>>, vector<1x8x128xf32>,
    %cst_28 = arith.constant 0.946174681 : f32
    %46 = vector.broadcast %cst_28 : f32 to vector<8x128xf32>
    %47 = arith.mulf %46, %11 : vector<8x128xf32>
    %cst_29 = arith.constant 0.31539157 : f32
    %48 = vector.broadcast %cst_29 : f32 to vector<8x128xf32>
    %49 = arith.subf %47, %48 : vector<8x128xf32>
    %c6 = arith.constant 6 : index
    %c0_30 = arith.constant 0 : index
    %c0_31 = arith.constant 0 : index
    %50 = vector.load %arg2[%c6, %c0_30, %c0_31] : memref<16x8x128xf32, #tpu.memory_space<vmem>>, vector<1x8x128xf32>
    %51 = vector.shape_cast %50 : vector<1x8x128xf32> to vector<8x128xf32>
    %52 = vector.shape_cast %49 : vector<8x128xf32> to vector<1x8x128xf32>
    tpu.vector_store %arg2[%c6, %c0_30, %c0_31], %52 {strides = array<i32>} : memref<16x8x128xf32, #tpu.memory_space<vmem>>, vector<1x8x128xf32>,
    %cst_32 = arith.constant -1.09254849 : f32
    %53 = vector.broadcast %cst_32 : f32 to vector<8x128xf32>
    %54 = arith.mulf %53, %7 : vector<8x128xf32>
    %c7 = arith.constant 7 : index
    %c0_33 = arith.constant 0 : index
    %c0_34 = arith.constant 0 : index
    %55 = vector.load %arg2[%c7, %c0_33, %c0_34] : memref<16x8x128xf32, #tpu.memory_space<vmem>>, vector<1x8x128xf32>
    %56 = vector.shape_cast %55 : vector<1x8x128xf32> to vector<8x128xf32>
    %57 = vector.shape_cast %54 : vector<8x128xf32> to vector<1x8x128xf32>
    tpu.vector_store %arg2[%c7, %c0_33, %c0_34], %57 {strides = array<i32>} : memref<16x8x128xf32, #tpu.memory_space<vmem>>, vector<1x8x128xf32>,
    %cst_35 = arith.constant 0.546274245 : f32
    %58 = vector.broadcast %cst_35 : f32 to vector<8x128xf32>
    %59 = arith.mulf %58, %12 : vector<8x128xf32>
    %c8 = arith.constant 8 : index
    %c0_36 = arith.constant 0 : index
    %c0_37 = arith.constant 0 : index
    %60 = vector.load %arg2[%c8, %c0_36, %c0_37] : memref<16x8x128xf32, #tpu.memory_space<vmem>>, vector<1x8x128xf32>
    %61 = vector.shape_cast %60 : vector<1x8x128xf32> to vector<8x128xf32>
    %62 = vector.shape_cast %59 : vector<8x128xf32> to vector<1x8x128xf32>
    tpu.vector_store %arg2[%c8, %c0_36, %c0_37], %62 {strides = array<i32>} : memref<16x8x128xf32, #tpu.memory_space<vmem>>, vector<1x8x128xf32>,
    %cst_38 = arith.constant 0.590043604 : f32
    %63 = vector.broadcast %cst_38 : f32 to vector<8x128xf32>
    %64 = arith.mulf %63, %3 : vector<8x128xf32>
    %cst_39 = arith.constant 3.000000e+00 : f32
    %65 = vector.broadcast %cst_39 : f32 to vector<8x128xf32>
    %66 = arith.mulf %65, %9 : vector<8x128xf32>
    %67 = arith.subf %10, %66 : vector<8x128xf32>
    %68 = arith.mulf %64, %67 : vector<8x128xf32>
    %c9 = arith.constant 9 : index
    %c0_40 = arith.constant 0 : index
    %c0_41 = arith.constant 0 : index
    %69 = vector.load %arg2[%c9, %c0_40, %c0_41] : memref<16x8x128xf32, #tpu.memory_space<vmem>>, vector<1x8x128xf32>
    %70 = vector.shape_cast %69 : vector<1x8x128xf32> to vector<8x128xf32>
    %71 = vector.shape_cast %68 : vector<8x128xf32> to vector<1x8x128xf32>
    tpu.vector_store %arg2[%c9, %c0_40, %c0_41], %71 {strides = array<i32>} : memref<16x8x128xf32, #tpu.memory_space<vmem>>, vector<1x8x128xf32>,
    %cst_42 = arith.constant 2.89061141 : f32
    %72 = vector.broadcast %cst_42 : f32 to vector<8x128xf32>
    %73 = arith.mulf %72, %6 : vector<8x128xf32>
    %74 = arith.mulf %73, %5 : vector<8x128xf32>
    %c10 = arith.constant 10 : index
    %c0_43 = arith.constant 0 : index
    %c0_44 = arith.constant 0 : index
    %75 = vector.load %arg2[%c10, %c0_43, %c0_44] : memref<16x8x128xf32, #tpu.memory_space<vmem>>, vector<1x8x128xf32>
    %76 = vector.shape_cast %75 : vector<1x8x128xf32> to vector<8x128xf32>
    %77 = vector.shape_cast %74 : vector<8x128xf32> to vector<1x8x128xf32>
    tpu.vector_store %arg2[%c10, %c0_43, %c0_44], %77 {strides = array<i32>} : memref<16x8x128xf32, #tpu.memory_space<vmem>>, vector<1x8x128xf32>,
    %cst_45 = arith.constant 0.457045794 : f32
    %78 = vector.broadcast %cst_45 : f32 to vector<8x128xf32>
    %79 = arith.mulf %78, %3 : vector<8x128xf32>
    %80 = arith.mulf %79, %16 : vector<8x128xf32>
    %c11 = arith.constant 11 : index
    %c0_46 = arith.constant 0 : index
    %c0_47 = arith.constant 0 : index
    %81 = vector.load %arg2[%c11, %c0_46, %c0_47] : memref<16x8x128xf32, #tpu.memory_space<vmem>>, vector<1x8x128xf32>
    %82 = vector.shape_cast %81 : vector<1x8x128xf32> to vector<8x128xf32>
    %83 = vector.shape_cast %80 : vector<8x128xf32> to vector<1x8x128xf32>
    tpu.vector_store %arg2[%c11, %c0_46, %c0_47], %83 {strides = array<i32>} : memref<16x8x128xf32, #tpu.memory_space<vmem>>, vector<1x8x128xf32>,
    %cst_48 = arith.constant 0.373176336 : f32
    %84 = vector.broadcast %cst_48 : f32 to vector<8x128xf32>
    %85 = arith.mulf %84, %5 : vector<8x128xf32>
    %cst_49 = arith.constant 5.000000e+00 : f32
    %86 = vector.broadcast %cst_49 : f32 to vector<8x128xf32>
    %87 = arith.mulf %86, %11 : vector<8x128xf32>
    %cst_50 = arith.constant 3.000000e+00 : f32
    %88 = vector.broadcast %cst_50 : f32 to vector<8x128xf32>
    %89 = arith.subf %87, %88 : vector<8x128xf32>
    %90 = arith.mulf %85, %89 : vector<8x128xf32>
    %c12 = arith.constant 12 : index
    %c0_51 = arith.constant 0 : index
    %c0_52 = arith.constant 0 : index
    %91 = vector.load %arg2[%c12, %c0_51, %c0_52] : memref<16x8x128xf32, #tpu.memory_space<vmem>>, vector<1x8x128xf32>
    %92 = vector.shape_cast %91 : vector<1x8x128xf32> to vector<8x128xf32>
    %93 = vector.shape_cast %90 : vector<8x128xf32> to vector<1x8x128xf32>
    tpu.vector_store %arg2[%c12, %c0_51, %c0_52], %93 {strides = array<i32>} : memref<16x8x128xf32, #tpu.memory_space<vmem>>, vector<1x8x128xf32>,
    %cst_53 = arith.constant 0.457045794 : f32
    %94 = vector.broadcast %cst_53 : f32 to vector<8x128xf32>
    %95 = arith.mulf %94, %1 : vector<8x128xf32>
    %96 = arith.mulf %95, %16 : vector<8x128xf32>
    %c13 = arith.constant 13 : index
    %c0_54 = arith.constant 0 : index
    %c0_55 = arith.constant 0 : index
    %97 = vector.load %arg2[%c13, %c0_54, %c0_55] : memref<16x8x128xf32, #tpu.memory_space<vmem>>, vector<1x8x128xf32>
    %98 = vector.shape_cast %97 : vector<1x8x128xf32> to vector<8x128xf32>
    %99 = vector.shape_cast %96 : vector<8x128xf32> to vector<1x8x128xf32>
    tpu.vector_store %arg2[%c13, %c0_54, %c0_55], %99 {strides = array<i32>} : memref<16x8x128xf32, #tpu.memory_space<vmem>>, vector<1x8x128xf32>,
    %cst_56 = arith.constant 1.44530571 : f32
    %100 = vector.broadcast %cst_56 : f32 to vector<8x128xf32>
    %101 = arith.mulf %100, %5 : vector<8x128xf32>
    %102 = arith.mulf %101, %12 : vector<8x128xf32>
    %c14 = arith.constant 14 : index
    %c0_57 = arith.constant 0 : index
    %c0_58 = arith.constant 0 : index
    %103 = vector.load %arg2[%c14, %c0_57, %c0_58] : memref<16x8x128xf32, #tpu.memory_space<vmem>>, vector<1x8x128xf32>
    %104 = vector.shape_cast %103 : vector<1x8x128xf32> to vector<8x128xf32>
    %105 = vector.shape_cast %102 : vector<8x128xf32> to vector<1x8x128xf32>
    tpu.vector_store %arg2[%c14, %c0_57, %c0_58], %105 {strides = array<i32>} : memref<16x8x128xf32, #tpu.memory_space<vmem>>, vector<1x8x128xf32>,
    %cst_59 = arith.constant 0.590043604 : f32
    %106 = vector.broadcast %cst_59 : f32 to vector<8x128xf32>
    %107 = arith.mulf %106, %1 : vector<8x128xf32>
    %cst_60 = arith.constant 3.000000e+00 : f32
    %108 = vector.broadcast %cst_60 : f32 to vector<8x128xf32>
    %109 = arith.mulf %108, %10 : vector<8x128xf32>
    %110 = arith.subf %109, %9 : vector<8x128xf32>
    %111 = arith.mulf %107, %110 : vector<8x128xf32>
    %c15 = arith.constant 15 : index
    %c0_61 = arith.constant 0 : index
    %c0_62 = arith.constant 0 : index
    %112 = vector.load %arg2[%c15, %c0_61, %c0_62] : memref<16x8x128xf32, #tpu.memory_space<vmem>>, vector<1x8x128xf32>
    %113 = vector.shape_cast %112 : vector<1x8x128xf32> to vector<8x128xf32>
    %114 = vector.shape_cast %111 : vector<8x128xf32> to vector<1x8x128xf32>
    tpu.vector_store %arg2[%c15, %c0_61, %c0_62], %114 {strides = array<i32>} : memref<16x8x128xf32, #tpu.memory_space<vmem>>, vector<1x8x128xf32>,
    return
  }
  func.func @transform_0(%arg0: i32) -> (i32, i32, i32) {
    %c0_i32 = arith.constant 0 : i32
    %c0_i32_0 = arith.constant 0 : i32
    %c0_i32_1 = arith.constant 0 : i32
    return %c0_i32, %arg0, %c0_i32_0 : i32, i32, i32
  }
  func.func @transform_1(%arg0: i32) -> (i32, i32, i32) {
    %c0_i32 = arith.constant 0 : i32
    %c0_i32_0 = arith.constant 0 : i32
    %c0_i32_1 = arith.constant 0 : i32
    return %c0_i32, %arg0, %c0_i32_0 : i32, i32, i32
  }
}

</mosaic_0001>

<llo_original>
// kernel: tpu_custom_call.1
$region0: #{tpu_custom_call.1}
  #allocation0 [shape = 'u32[]', space=smem, size = 0x4, offset = 0x4, fixed_abs, tag = 'smem constant byte address 0x4 - core index']
  #allocation1 [shape = 'u32[144,128]{1,0:T(1,128)}', space=vmem, size = 0x12000, scoped, tag = 'internal scratch']
  %s0 = inlined_call_operand.hbm [shape: f32[3,8,128], index: 0, kind: input, shape index: {}]
  %s1 = inlined_call_operand.hbm [shape: f32[16,8,128], index: 1, kind: output, shape index: {}]
  %s2 = sld [smem:[#allocation0]]
  $region18: #{tpu_custom_call.1} parent=0
    _
  %s4 = ssub.s32 1, %s2
  %s5 = scalar_select 0, %s4, %s2
  $region1: #{tpu_custom_call.1} parent=0
    #allocation2 [shape = 'u8[12288]{0}', space=vmem, size = 0x3000, scoped, tag = 'input window, operand 0, single buffered']
    #allocation3 [shape = 's32[1]{0}', space=sflag, size = 0x4, scoped, tag = 'scoped memory for tpu_custom_call.1']
    #allocation4 [shape = 's32[1]{0}', space=sflag, size = 0x4, scoped, tag = 'scoped memory for tpu_custom_call.1']
    #allocation5 [shape = 'u8[65536]{0}', space=vmem, size = 0x10000, scoped, tag = 'output window, operand 0, single buffered']
    %6 = vsyncpa [#allocation3], 0
    %7 = vsyncpa [#allocation4], 0
    // Predicated region
    $region2: #{tpu_custom_call.1} parent=1 // pred_check
      _
    $region3: #{tpu_custom_call.1} parent=1 // pred_check_branch
      %9 = sbr.rel (0) target = $region5
    $region4: #{tpu_custom_call.1} parent=1 // pred_region
      %s11 = ssub.s32 384, 384
      %12 = vsyncadd [#allocation3], %s11
      %s13 = sshll.u32 [#allocation2], 4
      %s14 = int_to_ptr.vmem [resolvable:$true] %s13
      %19 = dma.hbm_to_vmem [thread:$0]  %s0, 384, %s14, [#allocation3], 128, 128, 8
    $region5: #{tpu_custom_call.1} parent=1 // pred_fallthru
      _
    // Predicated region
    $region6: #{tpu_custom_call.1} parent=1 // pred_check
      _
    $region7: #{tpu_custom_call.1} parent=1 // pred_check_branch
      %21 = sbr.rel (0) target = $region9
    $region8: #{tpu_custom_call.1} parent=1 // pred_region
      %22 = dma.done [#allocation3], 384
    $region9: #{tpu_custom_call.1} parent=1 // pred_fallthru
      _
    %v23 = vld [vmem:[#allocation2] sm:$0xff]
    %s24 = scalar_lea.vmem [#allocation2], 8
    %v25 = vld [vmem:[%s24] sm:$0xff]
    %s26 = scalar_lea.vmem [#allocation2], 16
    %v27 = vld [vmem:[%s26] sm:$0xff]
    %v28 = vmul.f32 %v23, %v25
    %v29 = vmul.f32 %v23, %v27
    %v30 = vmul.f32 %v25, %v27
    %v31 = vmul.f32 %v23, %v23
    %v32 = vmul.f32 %v25, %v25
    %v33 = vmul.f32 %v27, %v27
    %v34 = vsub.f32 %v31, %v32
    %v35 = vmul.f32 %v33, 5.0
    %v36 = vsub.f32 1.0, %v35
    %37 = vst [vmem:[#allocation5] sm:$0xff] 0.2820948
    %v38 = vmul.f32 %v25, -0.48860252
    %s39 = scalar_lea.vmem [#allocation5], 8
    %40 = vst [vmem:[%s39] sm:$0xff] %v38
    %v41 = vmul.f32 %v27, 0.48860252
    %s42 = scalar_lea.vmem [#allocation5], 16
    %43 = vst [vmem:[%s42] sm:$0xff] %v41
    %v44 = vmul.f32 %v23, -0.48860252
    %s45 = scalar_lea.vmem [#allocation5], 24
    %46 = vst [vmem:[%s45] sm:$0xff] %v44
    %v47 = vmul.f32 %v28, 1.0925485
    %s48 = scalar_lea.vmem [#allocation5], 32
    %49 = vst [vmem:[%s48] sm:$0xff] %v47
    %v50 = vmul.f32 %v30, -1.0925485
    %s51 = scalar_lea.vmem [#allocation5], 40
    %52 = vst [vmem:[%s51] sm:$0xff] %v50
    %v53 = vmul.f32 %v33, 0.9461747
    %v54 = vsub.f32 %v53, 0.31539157
    %s55 = scalar_lea.vmem [#allocation5], 48
    %56 = vst [vmem:[%s55] sm:$0xff] %v54
    %v57 = vmul.f32 %v29, -1.0925485
    %s58 = scalar_lea.vmem [#allocation5], 56
    %59 = vst [vmem:[%s58] sm:$0xff] %v57
    %v60 = vmul.f32 %v34, 0.54627424
    %s61 = scalar_lea.vmem [#allocation5], 64
    %62 = vst [vmem:[%s61] sm:$0xff] %v60
    %v63 = vmul.f32 %v25, 0.5900436
    %v64 = vmul.f32 %v31, 3.0
    %v65 = vsub.f32 %v32, %v64
    %v66 = vmul.f32 %v63, %v65
    %s67 = scalar_lea.vmem [#allocation5], 72
    %68 = vst [vmem:[%s67] sm:$0xff] %v66
    %v69 = vmul.f32 %v28, 2.8906114
    %v70 = vmul.f32 %v69, %v27
    %s71 = scalar_lea.vmem [#allocation5], 80
    %72 = vst [vmem:[%s71] sm:$0xff] %v70
    %v73 = vmul.f32 %v25, 0.4570458
    %v74 = vmul.f32 %v73, %v36
    %s75 = scalar_lea.vmem [#allocation5], 88
    %76 = vst [vmem:[%s75] sm:$0xff] %v74
    %v77 = vmul.f32 %v27, 0.37317634
    %v78 = vsub.f32 %v35, 3.0
    %v79 = vmul.f32 %v77, %v78
    %s80 = scalar_lea.vmem [#allocation5], 96
    %81 = vst [vmem:[%s80] sm:$0xff] %v79
    %v82 = vmul.f32 %v23, 0.4570458
    %v83 = vmul.f32 %v82, %v36
    %s84 = scalar_lea.vmem [#allocation5], 104
    %85 = vst [vmem:[%s84] sm:$0xff] %v83
    %v86 = vmul.f32 %v27, 1.4453057
    %v87 = vmul.f32 %v86, %v34
    %s88 = scalar_lea.vmem [#allocation5], 112
    %89 = vst [vmem:[%s88] sm:$0xff] %v87
    %v90 = vmul.f32 %v23, 0.5900436
    %v91 = vmul.f32 %v32, 3.0
    %v92 = vsub.f32 %v91, %v31
    %v93 = vmul.f32 %v90, %v92
    %s94 = scalar_lea.vmem [#allocation5], 120
    %95 = vst [vmem:[%s94] sm:$0xff] %v93
    // Predicated region
    $region10: #{tpu_custom_call.1} parent=1 // pred_check
      _
    $region11: #{tpu_custom_call.1} parent=1 // pred_check_branch
      %97 = sbr.rel (0) target = $region13
    $region12: #{tpu_custom_call.1} parent=1 // pred_region
      %s99 = ssub.s32 2048, 2048
      %100 = vsyncadd [#allocation4], %s99
      %s101 = sshll.u32 [#allocation5], 4
      %s102 = int_to_ptr.vmem [resolvable:$true] %s101
      %107 = dma.vmem_to_hbm [thread:$0]  %s102, 2048, %s1, [#allocation4], 128, 128, 8
    $region13: #{tpu_custom_call.1} parent=1 // pred_fallthru
      _
    // Predicated region
    $region14: #{tpu_custom_call.1} parent=1 // pred_check
      _
    $region15: #{tpu_custom_call.1} parent=1 // pred_check_branch
      %109 = sbr.rel (0) target = $region17
    $region16: #{tpu_custom_call.1} parent=1 // pred_region
      %110 = dma.done [#allocation4], 2048
    $region17: #{tpu_custom_call.1} parent=1 // pred_fallthru
      _
    %111 = vsyncpa [#allocation3], 1
    %112 = vsyncpa [#allocation4], 1

</llo_original>
